<compile_context>
chip_gen: v7x
topology: tpu7x:2x2x1
jax: 0.10.0
libtpu: 0.0.40
codegen_flags: <defaults>
</compile_context>

<pallas_src>
import jax
import jax.numpy as jnp
from jax import lax
from jax.experimental import pallas as pl
from jax.experimental.pallas import tpu as pltpu

num_action = 2
num_latent = 1
num_states = 3
INPUT_DIM = num_states + num_action + num_latent   # 6
HIDDEN_DIM = 32
OUTPUT_DIM = num_states                            # 3


def _round_up(n, m):
    return ((n + m - 1) // m) * m


def _mlp_kernel(xT_ref, w1T_ref, b1T_ref, w2T_ref, b2T_ref, oT_ref):
    # Batch-on-lane: every tensor here has the batch tile on the lane axis.
    xT = xT_ref[...]                                              # [Din, TB]
    h = jnp.dot(w1T_ref[...], xT,                                 # [H, TB]
                preferred_element_type=jnp.float32,
                precision=lax.Precision.HIGHEST)
    h = jax.nn.sigmoid(h + b1T_ref[...])                          # bias [H,1] broadcasts over lanes (EUP)
    y = jnp.dot(w2T_ref[...], h,                                  # [Dout, TB]
                preferred_element_type=jnp.float32,
                precision=lax.Precision.HIGHEST)
    oT_ref[...] = jax.nn.sigmoid(y + b2T_ref[...]).astype(oT_ref.dtype)  # lane-dense store


def _choose_batch_tile(batch, block_b):
    """Pick a lane-dense batch tile (always a multiple of 128)."""
    # Correctness: callers may pass any block_b; clamp to a 128 multiple and
    # cap at 64K rows (keeps double-buffered streams ~8 MiB, fine on v5e too).
    block_b = _round_up(max(int(block_b), 128), 128)
    block_b = min(block_b, 65536)
    b_pad128 = _round_up(batch, 128)
    tb = min(block_b, b_pad128)
    # For large batches keep >=8 grid steps so ("parallel",) can split work
    # across v7x's two TensorCores and each core still pipelines -- but never
    # shrink tiles below 2048 rows (tiny tiles are per-step-overhead bound).
    eight_step_tile = _round_up(pl.cdiv(b_pad128, 8), 128)
    if eight_step_tile >= 2048:
        tb = min(tb, eight_step_tile)
    return tb


def _pallas_mlp_feature_major(xT, w1T, b1T, w2T, b2T, tb):
    """xT: [D_in, Bp] with Bp % tb == 0 -> yT: [D_out, Bp]."""
    d_in, b_pad = xT.shape
    hidden = w1T.shape[0]
    d_out = w2T.shape[0]
    grid = (b_pad // tb,)
    return pl.pallas_call(
        _mlp_kernel,
        out_shape=jax.ShapeDtypeStruct((d_out, b_pad), jnp.float32),
        grid_spec=pltpu.PrefetchScalarGridSpec(
            num_scalar_prefetch=0,
            grid=grid,
            in_specs=[
                pl.BlockSpec((d_in, tb), lambda i: (0, i)),     # x^T tiles stream over batch
                pl.BlockSpec((hidden, d_in), lambda i: (0, 0)), # W1^T (VMEM-resident)
                pl.BlockSpec((hidden, 1), lambda i: (0, 0)),    # b1^T (VMEM-resident)
                pl.BlockSpec((d_out, hidden), lambda i: (0, 0)),# W2^T (VMEM-resident)
                pl.BlockSpec((d_out, 1), lambda i: (0, 0)),     # b2^T (VMEM-resident)
            ],
            out_specs=pl.BlockSpec((d_out, tb), lambda i: (0, i)),
        ),
        compiler_params=pltpu.CompilerParams(
            dimension_semantics=("parallel",),
        ),
    )(xT, w1T, b1T, w2T, b2T)


def noise_mlp_forward_feature_major(xT, w1, b1, w2, b2, *, block_b=32768):
    """Fast path (no transpose passes): xT [D_in, B] -> yT [D_out, B]."""
    d_in, batch = xT.shape
    tb = _choose_batch_tile(batch, block_b)
    b_pad = _round_up(batch, tb)

    xT = jnp.asarray(xT, jnp.float32)
    if b_pad != batch:
        xT = jnp.pad(xT, ((0, 0), (0, b_pad - batch)))  # single pass, fuses with producer

    w1T = jnp.asarray(w1, jnp.float32).T                 # [H, D_in]   (tiny)
    b1T = jnp.asarray(b1, jnp.float32).reshape(-1, 1)    # [H, 1]
    w2T = jnp.asarray(w2, jnp.float32).T                 # [D_out, H]
    b2T = jnp.asarray(b2, jnp.float32).reshape(-1, 1)    # [D_out, 1]

    yT = _pallas_mlp_feature_major(xT, w1T, b1T, w2T, b2T, tb)
    return yT[:, :batch]


def noise_mlp_forward(x, w1, b1, w2, b2, *, block_b=32768):
    """Module-semantics wrapper: x [B, D_in] float32 -> [B, D_out] float32.

    For maximum end-to-end throughput prefer noise_mlp_forward_feature_major
    (avoids the input/output transpose passes entirely).
    """
    yT = noise_mlp_forward_feature_major(jnp.asarray(x, jnp.float32).T,
                                         w1, b1, w2, b2, block_b=block_b)
    return yT.T


def init_params(key, input_dim, hidden_dim, output_dim):
    """Deterministic params mimicking nn.Linear's U(-1/sqrt(fan_in), 1/sqrt(fan_in))."""
    k1, k2, k3, k4 = jax.random.split(key, 4)
    bound1 = 1.0 / jnp.sqrt(input_dim)
    bound2 = 1.0 / jnp.sqrt(hidden_dim)
    w1 = jax.random.uniform(k1, (input_dim, hidden_dim), jnp.float32, -bound1, bound1)
    b1 = jax.random.uniform(k2, (1, hidden_dim), jnp.float32, -bound1, bound1)
    w2 = jax.random.uniform(k3, (hidden_dim, output_dim), jnp.float32, -bound2, bound2)
    b2 = jax.random.uniform(k4, (1, output_dim), jnp.float32, -bound2, bound2)
    return w1, b1, w2, b2


if __name__ == "__main__":
    key = jax.random.PRNGKey(0)
    kx1, kx2, kp = jax.random.split(key, 3)
    w1, b1, w2, b2 = init_params(kp, INPUT_DIM, HIDDEN_DIM, OUTPUT_DIM)

    def ref_fn(x):
        return jax.nn.sigmoid(jax.nn.sigmoid(x @ w1 + b1) @ w2 + b2)

    # Small batch (module-native scale).
    x_small = jax.random.normal(kx1, (8, INPUT_DIM), dtype=jnp.float32)
    out_small = jax.block_until_ready(noise_mlp_forward(x_small, w1, b1, w2, b2))
    assert out_small.shape == (8, OUTPUT_DIM)
    assert jnp.allclose(out_small, ref_fn(x_small), atol=1e-4, rtol=1e-4)

    # Larger, non-multiple batch: exercises batch padding + tile selection.
    x_big = jax.random.normal(kx2, (1000, INPUT_DIM), dtype=jnp.float32)
    out_big = jax.block_until_ready(noise_mlp_forward(x_big, w1, b1, w2, b2))
    assert out_big.shape == (1000, OUTPUT_DIM)
    assert jnp.allclose(out_big, ref_fn(x_big), atol=1e-4, rtol=1e-4)

    # Feature-major fast path (no wrapper transposes).
    out_fm = jax.block_until_ready(
        noise_mlp_forward_feature_major(x_big.T, w1, b1, w2, b2))
    assert out_fm.shape == (OUTPUT_DIM, 1000)
    assert jnp.allclose(out_fm.T, ref_fn(x_big), atol=1e-4, rtol=1e-4)

    # Non-128-multiple block_b no longer breaks lane alignment (review concern).
    out_odd = jax.block_until_ready(
        noise_mlp_forward(x_big, w1, b1, w2, b2, block_b=1000))
    assert jnp.allclose(out_odd, ref_fn(x_big), atol=1e-4, rtol=1e-4)

    print("KERNEL_OK")
</pallas_src>

<mosaic_0001>
module attributes {stable_mosaic.version = 11 : i64} {
  func.func @_mlp_kernel(%arg0: i32, %arg1: memref<6x128xf32, #tpu.memory_space<vmem>>, %arg2: memref<32x6xf32, #tpu.memory_space<vmem>>, %arg3: memref<32x1xf32, #tpu.memory_space<vmem>>, %arg4: memref<3x32xf32, #tpu.memory_space<vmem>>, %arg5: memref<3x1xf32, #tpu.memory_space<vmem>>, %arg6: memref<3x128xf32, #tpu.memory_space<vmem>>) attributes {dimension_semantics = [#tpu.dimension_semantics<parallel>], iteration_bounds = array<i64: 1>, scalar_prefetch = 0 : i64, scratch_operands = 0 : i64, tpu.core_type = #tpu.core_type<tc>, window_params = [{transform_indices = @transform_0, window_bounds = array<i64: 6, 128>}, {pipeline_mode = #tpu.pipeline_mode<synchronous>, transform_indices = @transform_1, window_bounds = array<i64: 32, 6>}, {pipeline_mode = #tpu.pipeline_mode<synchronous>, transform_indices = @transform_2, window_bounds = array<i64: 32, 1>}, {pipeline_mode = #tpu.pipeline_mode<synchronous>, transform_indices = @transform_3, window_bounds = array<i64: 3, 32>}, {pipeline_mode = #tpu.pipeline_mode<synchronous>, transform_indices = @transform_4, window_bounds = array<i64: 3, 1>}, {transform_indices = @transform_5, window_bounds = array<i64: 3, 128>}]} {
    %c0 = arith.constant 0 : index
    %c0_0 = arith.constant 0 : index
    %0 = vector.load %arg1[%c0, %c0_0] : memref<6x128xf32, #tpu.memory_space<vmem>>, vector<6x128xf32>
    %c0_1 = arith.constant 0 : index
    %c0_2 = arith.constant 0 : index
    %1 = vector.load %arg2[%c0_1, %c0_2] : memref<32x6xf32, #tpu.memory_space<vmem>>, vector<32x6xf32>
    %cst = arith.constant dense<0.000000e+00> : vector<32x128xf32>
    %2 = tpu.matmul %1, %0, %cst {dimension_numbers = #tpu.dot_dimension_numbers<[1], [0], [0], [1], [0, 0, 1, 1], [], []>, precision = #tpu.contract_precision<fp32>} : vector<32x6xf32>, vector<6x128xf32>, vector<32x128xf32> -> vector<32x128xf32>
    %c0_3 = arith.constant 0 : index
    %c0_4 = arith.constant 0 : index
    %3 = vector.load %arg3[%c0_3, %c0_4] : memref<32x1xf32, #tpu.memory_space<vmem>>, vector<32x1xf32>
    %4 = vector.broadcast %3 : vector<32x1xf32> to vector<32x128xf32>
    %5 = arith.addf %2, %4 : vector<32x128xf32>
    %6 = arith.negf %5 : vector<32x128xf32>
    %7 = math.exp %6 : vector<32x128xf32>
    %cst_5 = arith.constant 1.000000e+00 : f32
    %8 = vector.broadcast %cst_5 : f32 to vector<32x128xf32>
    %9 = arith.addf %8, %7 : vector<32x128xf32>
    %10 = arith.divf %8, %9 : vector<32x128xf32>
    %c0_6 = arith.constant 0 : index
    %c0_7 = arith.constant 0 : index
    %11 = vector.load %arg4[%c0_6, %c0_7] : memref<3x32xf32, #tpu.memory_space<vmem>>, vector<3x32xf32>
    %cst_8 = arith.constant dense<0.000000e+00> : vector<3x128xf32>
    %12 = tpu.matmul %11, %10, %cst_8 {dimension_numbers = #tpu.dot_dimension_numbers<[1], [0], [0], [1], [0, 0, 1, 1], [], []>, precision = #tpu.contract_precision<fp32>} : vector<3x32xf32>, vector<32x128xf32>, vector<3x128xf32> -> vector<3x128xf32>
    %c0_9 = arith.constant 0 : index
    %c0_10 = arith.constant 0 : index
    %13 = vector.load %arg5[%c0_9, %c0_10] : memref<3x1xf32, #tpu.memory_space<vmem>>, vector<3x1xf32>
    %14 = vector.broadcast %13 : vector<3x1xf32> to vector<3x128xf32>
    %15 = arith.addf %12, %14 : vector<3x128xf32>
    %16 = arith.negf %15 : vector<3x128xf32>
    %17 = math.exp %16 : vector<3x128xf32>
    %cst_11 = arith.constant 1.000000e+00 : f32
    %18 = vector.broadcast %cst_11 : f32 to vector<3x128xf32>
    %19 = arith.addf %18, %17 : vector<3x128xf32>
    %20 = arith.divf %18, %19 : vector<3x128xf32>
    %c0_12 = arith.constant 0 : index
    %c0_13 = arith.constant 0 : index
    %21 = vector.load %arg6[%c0_12, %c0_13] : memref<3x128xf32, #tpu.memory_space<vmem>>, vector<3x128xf32>
    tpu.vector_store %arg6[%c0_12, %c0_13], %20 {strides = array<i32>} : memref<3x128xf32, #tpu.memory_space<vmem>>, vector<3x128xf32>,
    return
  }
  func.func @transform_0(%arg0: i32) -> (i32, i32) {
    %c0_i32 = arith.constant 0 : i32
    %c0_i32_0 = arith.constant 0 : i32
    return %c0_i32, %arg0 : i32, i32
  }
  func.func @transform_1(%arg0: i32) -> (i32, i32) {
    %c0_i32 = arith.constant 0 : i32
    %c0_i32_0 = arith.constant 0 : i32
    %c0_i32_1 = arith.constant 0 : i32
    return %c0_i32, %c0_i32_0 : i32, i32
  }
  func.func @transform_2(%arg0: i32) -> (i32, i32) {
    %c0_i32 = arith.constant 0 : i32
    %c0_i32_0 = arith.constant 0 : i32
    %c0_i32_1 = arith.constant 0 : i32
    return %c0_i32, %c0_i32_0 : i32, i32
  }
  func.func @transform_3(%arg0: i32) -> (i32, i32) {
    %c0_i32 = arith.constant 0 : i32
    %c0_i32_0 = arith.constant 0 : i32
    %c0_i32_1 = arith.constant 0 : i32
    return %c0_i32, %c0_i32_0 : i32, i32
  }
  func.func @transform_4(%arg0: i32) -> (i32, i32) {
    %c0_i32 = arith.constant 0 : i32
    %c0_i32_0 = arith.constant 0 : i32
    %c0_i32_1 = arith.constant 0 : i32
    return %c0_i32, %c0_i32_0 : i32, i32
  }
  func.func @transform_5(%arg0: i32) -> (i32, i32) {
    %c0_i32 = arith.constant 0 : i32
    %c0_i32_0 = arith.constant 0 : i32
    return %c0_i32, %arg0 : i32, i32
  }
}

</mosaic_0001>

<llo_original>
// kernel: tpu_custom_call.1
$region0: #{tpu_custom_call.1}
  #allocation0 [shape = 'u32[]', space=smem, size = 0x4, offset = 0x4, fixed_abs, tag = 'smem constant byte address 0x4 - core index']
  #allocation1 [shape = 'u32[144,128]{1,0:T(1,128)}', space=vmem, size = 0x12000, scoped, tag = 'internal scratch']
  %s0 = inlined_call_operand.vmem [shape: f32[6,128], index: 0, kind: input, shape index: {}]
  %s1 = inlined_call_operand.vmem [shape: f32[32,6], index: 1, kind: input, shape index: {}]
  %s2 = inlined_call_operand.vmem [shape: f32[32,1], index: 2, kind: input, shape index: {}]
  %s3 = inlined_call_operand.vmem [shape: f32[3,32], index: 3, kind: input, shape index: {}]
  %s4 = inlined_call_operand.vmem [shape: f32[3,1], index: 4, kind: input, shape index: {}]
  %s5 = inlined_call_operand.hbm [shape: f32[3,128], index: 5, kind: output, shape index: {}]
  %s6 = sld [smem:[#allocation0]]
  $region30: #{tpu_custom_call.1} parent=0
    _
  %s8 = ssub.s32 1, %s6
  %s9 = scalar_select 0, %s8, %s6
  $region1: #{tpu_custom_call.1} parent=0
    #allocation2 [shape = 'u8[2048]{0}', space=vmem, size = 0x800, scoped, tag = 'output window, operand 0, single buffered']
    #allocation3 [shape = 's32[1]{0}', space=sflag, size = 0x4, scoped, tag = 'scoped memory for tpu_custom_call.1']
    %10 = vsyncpa [#allocation3], 0
    // Predicated region
    $region2: #{tpu_custom_call.1} parent=1 // pred_check
      _
    $region3: #{tpu_custom_call.1} parent=1 // pred_check_branch
      %12 = sbr.rel (0) target = $region5
    $region4: #{tpu_custom_call.1} parent=1 // pred_region
      _
    $region5: #{tpu_custom_call.1} parent=1 // pred_fallthru
      _
    // Predicated region
    $region6: #{tpu_custom_call.1} parent=1 // pred_check
      _
    $region7: #{tpu_custom_call.1} parent=1 // pred_check_branch
      %14 = sbr.rel (0) target = $region9
    $region8: #{tpu_custom_call.1} parent=1 // pred_region
      _
    $region9: #{tpu_custom_call.1} parent=1 // pred_fallthru
      _
    // Predicated region
    $region10: #{tpu_custom_call.1} parent=1 // pred_check
      _
    $region11: #{tpu_custom_call.1} parent=1 // pred_check_branch
      %16 = sbr.rel (0) target = $region13
    $region12: #{tpu_custom_call.1} parent=1 // pred_region
      _
    $region13: #{tpu_custom_call.1} parent=1 // pred_fallthru
      _
    // Predicated region
    $region14: #{tpu_custom_call.1} parent=1 // pred_check
      _
    $region15: #{tpu_custom_call.1} parent=1 // pred_check_branch
      %18 = sbr.rel (0) target = $region17
    $region16: #{tpu_custom_call.1} parent=1 // pred_region
      _
    $region17: #{tpu_custom_call.1} parent=1 // pred_fallthru
      _
    // Predicated region
    $region18: #{tpu_custom_call.1} parent=1 // pred_check
      _
    $region19: #{tpu_custom_call.1} parent=1 // pred_check_branch
      %20 = sbr.rel (0) target = $region21
    $region20: #{tpu_custom_call.1} parent=1 // pred_region
      _
    $region21: #{tpu_custom_call.1} parent=1 // pred_fallthru
      _
    %v21 = vld [vmem:[%s0] sm:$0x3f]
    %v22 = vld [vmem:[%s1] sm:$0xff]
    %v23 = vld [vmem:[%s1 + $0x8] sm:$0xff]
    %v24 = vld [vmem:[%s1 + $0x10] sm:$0xff]
    %v25 = vld [vmem:[%s1 + $0x18] sm:$0xff]
    %v26 = vld [vmem:[%s2] sm:$0xff]
    %v27 = vld [vmem:[%s2 + $0x8] sm:$0xff]
    %v28 = vld [vmem:[%s2 + $0x10] sm:$0xff]
    %v29 = vld [vmem:[%s2 + $0x18] sm:$0xff]
    %31 = vset.pattern.permute.xlu0 0
    %32 = vperm.xlu0 %31, %v26
    %v33 = vpop.permute.xlu0 %32
    %36 = vset.pattern.permute.xlu0 0
    %37 = vperm.xlu0 %36, %v27
    %v38 = vpop.permute.xlu0 %37
    %41 = vset.pattern.permute.xlu0 0
    %42 = vperm.xlu0 %41, %v28
    %v43 = vpop.permute.xlu0 %42
    %46 = vset.pattern.permute.xlu0 0
    %47 = vperm.xlu0 %46, %v29
    %v48 = vpop.permute.xlu0 %47
    %vm50 = vcmask 48128
    %v52 = vsel %vm50, %v22, 0
    %v55 = vsel %vm50, %v23, 0
    %v58 = vsel %vm50, %v24, 0
    %v61 = vsel %vm50, %v25, 0
    %vm63 = vcmask 1045504
    %v65 = vsel %vm63, %v21, 0
    %67 = vmatprep.subr.mxu0 0.0
    %v68 = vand.u32 %v65, 4294901760
    %69 = vmatpush1.msra.mxu0 %v68
    %70 = vmatprep.subr.mxu0 0.0
    %71 = vmatpush1.msra.mxu0 0.0
    %72 = vmatprep.subr.mxu0 0.0
    %73 = vmatpush1.msra.mxu0 0.0
    %74 = vmatprep.subr.mxu0 0.0
    %75 = vmatpush1.msra.mxu0 0.0
    %76 = vmatprep.subr.mxu0 0.0
    %77 = vmatpush1.msra.mxu0 0.0
    %78 = vmatprep.subr.mxu0 0.0
    %79 = vmatpush1.msra.mxu0 0.0
    %80 = vmatprep.subr.mxu0 0.0
    %81 = vmatpush1.msra.mxu0 0.0
    %82 = vmatprep.subr.mxu0 0.0
    %83 = vmatpush1.msra.mxu0 0.0
    %84 = vmatprep.subr.mxu0 0.0
    %85 = vmatpush1.msra.mxu0 0.0
    %86 = vmatprep.subr.mxu0 0.0
    %87 = vmatpush1.msra.mxu0 0.0
    %88 = vmatprep.subr.mxu0 0.0
    %89 = vmatpush1.msra.mxu0 0.0
    %90 = vmatprep.subr.mxu0 0.0
    %91 = vmatpush1.msra.mxu0 0.0
    %92 = vmatprep.subr.mxu0 0.0
    %93 = vmatpush1.msra.mxu0 0.0
    %94 = vmatprep.subr.mxu0 0.0
    %95 = vmatpush1.msra.mxu0 0.0
    %96 = vmatprep.subr.mxu0 0.0
    %97 = vmatpush1.msra.mxu0 0.0
    %98 = vmatprep.subr.mxu0 0.0
    %99 = vmatpush1.msra.mxu0 0.0
    %100 = vmatprep.subr.mxu0 0.0
    %101 = vmatpush1.msra.mxu0 0.0
    %102 = vmatprep.subr.mxu0 0.0
    %103 = vmatpush1.msra.mxu0 0.0
    %104 = vmatprep.subr.mxu0 0.0
    %105 = vmatpush1.msra.mxu0 0.0
    %106 = vmatprep.subr.mxu0 0.0
    %107 = vmatpush1.msra.mxu0 0.0
    %108 = vmatprep.subr.mxu0 0.0
    %109 = vmatpush1.msra.mxu0 0.0
    %110 = vmatprep.subr.mxu0 0.0
    %111 = vmatpush1.msra.mxu0 0.0
    %112 = vmatprep.subr.mxu0 0.0
    %113 = vmatpush1.msra.mxu0 0.0
    %114 = vmatprep.subr.mxu0 0.0
    %115 = vmatpush1.msra.mxu0 0.0
    %116 = vmatprep.subr.mxu0 0.0
    %117 = vmatpush1.msra.mxu0 0.0
    %118 = vmatprep.subr.mxu0 0.0
    %119 = vmatpush1.msra.mxu0 0.0
    %120 = vmatprep.subr.mxu0 0.0
    %121 = vmatpush1.msra.mxu0 0.0
    %122 = vmatprep.subr.mxu0 0.0
    %123 = vmatpush1.msra.mxu0 0.0
    %124 = vmatprep.subr.mxu0 0.0
    %125 = vmatpush1.msra.mxu0 0.0
    %126 = vmatprep.subr.mxu0 0.0
    %127 = vmatpush1.msra.mxu0 0.0
    %128 = vmatprep.subr.mxu0 0.0
    %129 = vmatpush1.msra.mxu0 0.0
    %130 = vmatprep.subr.mxu0 0.0
    %131 = vmatpush1.msra.mxu0 0.0
    %132 = vmatprep.mubr.f32.mxu0 0.0
    %v133 = vand.u32 %v52, 4294901760
    %v134 = vsub.f32 %v52, %v133
    %v135 = vand.u32 %v134, 4294901760
    %v136 = vsub.f32 %v134, %v135
    %v137 = vand.u32 %v136, 4294901760
    %138 = vmatmul.mubr.f32.gmra.mrb[0].mxu0 %v137
    %v139 = vpop.f32.mrb[0].mxu0
    %v140 = vadd.f32 %v33, %v139
    %v141 = vpop.f32.mrb[0].mxu0
    %142 = vmatprep.mubr.f32.mxu0 0.0
    %v143 = vand.u32 %v55, 4294901760
    %v144 = vsub.f32 %v55, %v143
    %v145 = vand.u32 %v144, 4294901760
    %v146 = vsub.f32 %v144, %v145
    %v147 = vand.u32 %v146, 4294901760
    %148 = vmatmul.mubr.f32.gmra.mrb[0].mxu0 %v147
    %v149 = vpop.f32.mrb[0].mxu0
    %v150 = vadd.f32 %v38, %v149
    %v151 = vpop.f32.mrb[0].mxu0
    %152 = vmatprep.mubr.f32.mxu0 0.0
    %v153 = vand.u32 %v58, 4294901760
    %v154 = vsub.f32 %v58, %v153
    %v155 = vand.u32 %v154, 4294901760
    %v156 = vsub.f32 %v154, %v155
    %v157 = vand.u32 %v156, 4294901760
    %158 = vmatmul.mubr.f32.gmra.mrb[0].mxu0 %v157
    %v159 = vpop.f32.mrb[0].mxu0
    %v160 = vadd.f32 %v43, %v159
    %v161 = vpop.f32.mrb[0].mxu0
    %162 = vmatprep.mubr.f32.mxu0 0.0
    %v163 = vand.u32 %v61, 4294901760
    %v164 = vsub.f32 %v61, %v163
    %v165 = vand.u32 %v164, 4294901760
    %v166 = vsub.f32 %v164, %v165
    %v167 = vand.u32 %v166, 4294901760
    %168 = vmatmul.mubr.f32.gmra.mrb[0].mxu0 %v167
    %v169 = vpop.f32.mrb[0].mxu0
    %v170 = vadd.f32 %v48, %v169
    %v171 = vpop.f32.mrb[0].mxu0
    %172 = vdwg.mxu0
    %173 = vmatprep.subr.mxu0 0.0
    %v174 = vand.u32 %v65, 4294901760
    %v175 = vsub.f32 %v65, %v174
    %v176 = vand.u32 %v175, 4294901760
    %v177 = vsub.f32 %v175, %v176
    %v178 = vand.u32 %v177, 4294901760
    %179 = vmatpush1.msra.mxu0 %v178
    %180 = vmatprep.subr.mxu0 0.0
    %181 = vmatpush1.msra.mxu0 0.0
    %182 = vmatprep.subr.mxu0 0.0
    %183 = vmatpush1.msra.mxu0 0.0
    %184 = vmatprep.subr.mxu0 0.0
    %185 = vmatpush1.msra.mxu0 0.0
    %186 = vmatprep.subr.mxu0 0.0
    %187 = vmatpush1.msra.mxu0 0.0
    %188 = vmatprep.subr.mxu0 0.0
    %189 = vmatpush1.msra.mxu0 0.0
    %190 = vmatprep.subr.mxu0 0.0
    %191 = vmatpush1.msra.mxu0 0.0
    %192 = vmatprep.subr.mxu0 0.0
    %193 = vmatpush1.msra.mxu0 0.0
    %194 = vmatprep.subr.mxu0 0.0
    %195 = vmatpush1.msra.mxu0 0.0
    %196 = vmatprep.subr.mxu0 0.0
    %197 = vmatpush1.msra.mxu0 0.0
    %198 = vmatprep.subr.mxu0 0.0
    %199 = vmatpush1.msra.mxu0 0.0
    %200 = vmatprep.subr.mxu0 0.0
    %201 = vmatpush1.msra.mxu0 0.0
    %202 = vmatprep.subr.mxu0 0.0
    %203 = vmatpush1.msra.mxu0 0.0
    %204 = vmatprep.subr.mxu0 0.0
    %205 = vmatpush1.msra.mxu0 0.0
    %206 = vmatprep.subr.mxu0 0.0
    %207 = vmatpush1.msra.mxu0 0.0
    %208 = vmatprep.subr.mxu0 0.0
    %209 = vmatpush1.msra.mxu0 0.0
    %210 = vmatprep.subr.mxu0 0.0
    %211 = vmatpush1.msra.mxu0 0.0
    %212 = vmatprep.subr.mxu0 0.0
    %213 = vmatpush1.msra.mxu0 0.0
    %214 = vmatprep.subr.mxu0 0.0
    %215 = vmatpush1.msra.mxu0 0.0
    %216 = vmatprep.subr.mxu0 0.0
    %217 = vmatpush1.msra.mxu0 0.0
    %218 = vmatprep.subr.mxu0 0.0
    %219 = vmatpush1.msra.mxu0 0.0
    %220 = vmatprep.subr.mxu0 0.0
    %221 = vmatpush1.msra.mxu0 0.0
    %222 = vmatprep.subr.mxu0 0.0
    %223 = vmatpush1.msra.mxu0 0.0
    %224 = vmatprep.subr.mxu0 0.0
    %225 = vmatpush1.msra.mxu0 0.0
    %226 = vmatprep.subr.mxu0 0.0
    %227 = vmatpush1.msra.mxu0 0.0
    %228 = vmatprep.subr.mxu0 0.0
    %229 = vmatpush1.msra.mxu0 0.0
    %230 = vmatprep.subr.mxu0 0.0
    %231 = vmatpush1.msra.mxu0 0.0
    %232 = vmatprep.subr.mxu0 0.0
    %233 = vmatpush1.msra.mxu0 0.0
    %234 = vmatprep.subr.mxu0 0.0
    %235 = vmatpush1.msra.mxu0 0.0
    %236 = vmatprep.subr.mxu0 0.0
    %237 = vmatpush1.msra.mxu0 0.0
    %238 = vmatprep.subr.mxu0 0.0
    %239 = vmatpush1.msra.mxu0 0.0
    %240 = vmatprep.subr.mxu0 0.0
    %241 = vmatpush1.msra.mxu0 0.0
    %242 = vmatprep.mubr.f32.mxu0 0.0
    %v243 = vand.u32 %v52, 4294901760
    %244 = vmatmul.mubr.f32.gmra.mrb[0].mxu0 %v243
    %v245 = vpop.f32.mrb[0].mxu0
    %v246 = vadd.f32 %v140, %v245
    %v247 = vpop.f32.mrb[0].mxu0
    %248 = vmatprep.mubr.f32.mxu0 0.0
    %v249 = vand.u32 %v55, 4294901760
    %250 = vmatmul.mubr.f32.gmra.mrb[0].mxu0 %v249
    %v251 = vpop.f32.mrb[0].mxu0
    %v252 = vadd.f32 %v150, %v251
    %v253 = vpop.f32.mrb[0].mxu0
    %254 = vmatprep.mubr.f32.mxu0 0.0
    %v255 = vand.u32 %v58, 4294901760
    %256 = vmatmul.mubr.f32.gmra.mrb[0].mxu0 %v255
    %v257 = vpop.f32.mrb[0].mxu0
    %v258 = vadd.f32 %v160, %v257
    %v259 = vpop.f32.mrb[0].mxu0
    %260 = vmatprep.mubr.f32.mxu0 0.0
    %v261 = vand.u32 %v61, 4294901760
    %262 = vmatmul.mubr.f32.gmra.mrb[0].mxu0 %v261
    %v263 = vpop.f32.mrb[0].mxu0
    %v264 = vadd.f32 %v170, %v263
    %v265 = vpop.f32.mrb[0].mxu0
    %266 = vdwg.mxu0
    %267 = vmatprep.subr.mxu0 0.0
    %v268 = vand.u32 %v65, 4294901760
    %v269 = vsub.f32 %v65, %v268
    %270 = vmatpush1.msra.mxu0 %v269
    %271 = vmatprep.subr.mxu0 0.0
    %272 = vmatpush1.msra.mxu0 0.0
    %273 = vmatprep.subr.mxu0 0.0
    %274 = vmatpush1.msra.mxu0 0.0
    %275 = vmatprep.subr.mxu0 0.0
    %276 = vmatpush1.msra.mxu0 0.0
    %277 = vmatprep.subr.mxu0 0.0
    %278 = vmatpush1.msra.mxu0 0.0
    %279 = vmatprep.subr.mxu0 0.0
    %280 = vmatpush1.msra.mxu0 0.0
    %281 = vmatprep.subr.mxu0 0.0
    %282 = vmatpush1.msra.mxu0 0.0
    %283 = vmatprep.subr.mxu0 0.0
    %284 = vmatpush1.msra.mxu0 0.0
    %285 = vmatprep.subr.mxu0 0.0
    %286 = vmatpush1.msra.mxu0 0.0
    %287 = vmatprep.subr.mxu0 0.0
    %288 = vmatpush1.msra.mxu0 0.0
    %289 = vmatprep.subr.mxu0 0.0
    %290 = vmatpush1.msra.mxu0 0.0
    %291 = vmatprep.subr.mxu0 0.0
    %292 = vmatpush1.msra.mxu0 0.0
    %293 = vmatprep.subr.mxu0 0.0
    %294 = vmatpush1.msra.mxu0 0.0
    %295 = vmatprep.subr.mxu0 0.0
    %296 = vmatpush1.msra.mxu0 0.0
    %297 = vmatprep.subr.mxu0 0.0
    %298 = vmatpush1.msra.mxu0 0.0
    %299 = vmatprep.subr.mxu0 0.0
    %300 = vmatpush1.msra.mxu0 0.0
    %301 = vmatprep.subr.mxu0 0.0
    %302 = vmatpush1.msra.mxu0 0.0
    %303 = vmatprep.subr.mxu0 0.0
    %304 = vmatpush1.msra.mxu0 0.0
    %305 = vmatprep.subr.mxu0 0.0
    %306 = vmatpush1.msra.mxu0 0.0
    %307 = vmatprep.subr.mxu0 0.0
    %308 = vmatpush1.msra.mxu0 0.0
    %309 = vmatprep.subr.mxu0 0.0
    %310 = vmatpush1.msra.mxu0 0.0
    %311 = vmatprep.subr.mxu0 0.0
    %312 = vmatpush1.msra.mxu0 0.0
    %313 = vmatprep.subr.mxu0 0.0
    %314 = vmatpush1.msra.mxu0 0.0
    %315 = vmatprep.subr.mxu0 0.0
    %316 = vmatpush1.msra.mxu0 0.0
    %317 = vmatprep.subr.mxu0 0.0
    %318 = vmatpush1.msra.mxu0 0.0
    %319 = vmatprep.subr.mxu0 0.0
    %320 = vmatpush1.msra.mxu0 0.0
    %321 = vmatprep.subr.mxu0 0.0
    %322 = vmatpush1.msra.mxu0 0.0
    %323 = vmatprep.subr.mxu0 0.0
    %324 = vmatpush1.msra.mxu0 0.0
    %325 = vmatprep.subr.mxu0 0.0
    %326 = vmatpush1.msra.mxu0 0.0
    %327 = vmatprep.subr.mxu0 0.0
    %328 = vmatpush1.msra.mxu0 0.0
    %329 = vmatprep.subr.mxu0 0.0
    %330 = vmatpush1.msra.mxu0 0.0
    %331 = vmatprep.subr.mxu0 0.0
    %332 = vmatpush1.msra.mxu0 0.0
    %333 = vmatprep.mubr.f32.mxu0 0.0
    %v334 = vand.u32 %v52, 4294901760
    %v335 = vsub.f32 %v52, %v334
    %336 = vmatmul.mubr.f32.gmra.mrb[0].mxu0 %v335
    %v337 = vpop.f32.mrb[0].mxu0
    %v338 = vadd.f32 %v246, %v337
    %v339 = vpop.f32.mrb[0].mxu0
    %340 = vmatprep.mubr.f32.mxu0 0.0
    %v341 = vand.u32 %v55, 4294901760
    %v342 = vsub.f32 %v55, %v341
    %343 = vmatmul.mubr.f32.gmra.mrb[0].mxu0 %v342
    %v344 = vpop.f32.mrb[0].mxu0
    %v345 = vadd.f32 %v252, %v344
    %v346 = vpop.f32.mrb[0].mxu0
    %347 = vmatprep.mubr.f32.mxu0 0.0
    %v348 = vand.u32 %v58, 4294901760
    %v349 = vsub.f32 %v58, %v348
    %350 = vmatmul.mubr.f32.gmra.mrb[0].mxu0 %v349
    %v351 = vpop.f32.mrb[0].mxu0
    %v352 = vadd.f32 %v258, %v351
    %v353 = vpop.f32.mrb[0].mxu0
    %354 = vmatprep.mubr.f32.mxu0 0.0
    %v355 = vand.u32 %v61, 4294901760
    %v356 = vsub.f32 %v61, %v355
    %357 = vmatmul.mubr.f32.gmra.mrb[0].mxu0 %v356
    %v358 = vpop.f32.mrb[0].mxu0
    %v359 = vadd.f32 %v264, %v358
    %v360 = vpop.f32.mrb[0].mxu0
    %361 = vdwg.mxu0
    %362 = vmatprep.subr.mxu0 0.0
    %v363 = vand.u32 %v65, 4294901760
    %364 = vmatpush1.msra.mxu0 %v363
    %365 = vmatprep.subr.mxu0 0.0
    %366 = vmatpush1.msra.mxu0 0.0
    %367 = vmatprep.subr.mxu0 0.0
    %368 = vmatpush1.msra.mxu0 0.0
    %369 = vmatprep.subr.mxu0 0.0
    %370 = vmatpush1.msra.mxu0 0.0
    %371 = vmatprep.subr.mxu0 0.0
    %372 = vmatpush1.msra.mxu0 0.0
    %373 = vmatprep.subr.mxu0 0.0
    %374 = vmatpush1.msra.mxu0 0.0
    %375 = vmatprep.subr.mxu0 0.0
    %376 = vmatpush1.msra.mxu0 0.0
    %377 = vmatprep.subr.mxu0 0.0
    %378 = vmatpush1.msra.mxu0 0.0
    %379 = vmatprep.subr.mxu0 0.0
    %380 = vmatpush1.msra.mxu0 0.0
    %381 = vmatprep.subr.mxu0 0.0
    %382 = vmatpush1.msra.mxu0 0.0
    %383 = vmatprep.subr.mxu0 0.0
    %384 = vmatpush1.msra.mxu0 0.0
    %385 = vmatprep.subr.mxu0 0.0
    %386 = vmatpush1.msra.mxu0 0.0
    %387 = vmatprep.subr.mxu0 0.0
    %388 = vmatpush1.msra.mxu0 0.0
    %389 = vmatprep.subr.mxu0 0.0
    %390 = vmatpush1.msra.mxu0 0.0
    %391 = vmatprep.subr.mxu0 0.0
    %392 = vmatpush1.msra.mxu0 0.0
    %393 = vmatprep.subr.mxu0 0.0
    %394 = vmatpush1.msra.mxu0 0.0
    %395 = vmatprep.subr.mxu0 0.0
    %396 = vmatpush1.msra.mxu0 0.0
    %397 = vmatprep.subr.mxu0 0.0
    %398 = vmatpush1.msra.mxu0 0.0
    %399 = vmatprep.subr.mxu0 0.0
    %400 = vmatpush1.msra.mxu0 0.0
    %401 = vmatprep.subr.mxu0 0.0
    %402 = vmatpush1.msra.mxu0 0.0
    %403 = vmatprep.subr.mxu0 0.0
    %404 = vmatpush1.msra.mxu0 0.0
    %405 = vmatprep.subr.mxu0 0.0
    %406 = vmatpush1.msra.mxu0 0.0
    %407 = vmatprep.subr.mxu0 0.0
    %408 = vmatpush1.msra.mxu0 0.0
    %409 = vmatprep.subr.mxu0 0.0
    %410 = vmatpush1.msra.mxu0 0.0
    %411 = vmatprep.subr.mxu0 0.0
    %412 = vmatpush1.msra.mxu0 0.0
    %413 = vmatprep.subr.mxu0 0.0
    %414 = vmatpush1.msra.mxu0 0.0
    %415 = vmatprep.subr.mxu0 0.0
    %416 = vmatpush1.msra.mxu0 0.0
    %417 = vmatprep.subr.mxu0 0.0
    %418 = vmatpush1.msra.mxu0 0.0
    %419 = vmatprep.subr.mxu0 0.0
    %420 = vmatpush1.msra.mxu0 0.0
    %421 = vmatprep.subr.mxu0 0.0
    %422 = vmatpush1.msra.mxu0 0.0
    %423 = vmatprep.subr.mxu0 0.0
    %424 = vmatpush1.msra.mxu0 0.0
    %425 = vmatprep.subr.mxu0 0.0
    %426 = vmatpush1.msra.mxu0 0.0
    %427 = vmatprep.mubr.f32.mxu0 0.0
    %v428 = vand.u32 %v52, 4294901760
    %v429 = vsub.f32 %v52, %v428
    %v430 = vand.u32 %v429, 4294901760
    %431 = vmatmul.mubr.f32.gmra.mrb[0].mxu0 %v430
    %v432 = vpop.f32.mrb[0].mxu0
    %v433 = vadd.f32 %v338, %v432
    %v434 = vpop.f32.mrb[0].mxu0
    %435 = vmatprep.mubr.f32.mxu0 0.0
    %v436 = vand.u32 %v55, 4294901760
    %v437 = vsub.f32 %v55, %v436
    %v438 = vand.u32 %v437, 4294901760
    %439 = vmatmul.mubr.f32.gmra.mrb[0].mxu0 %v438
    %v440 = vpop.f32.mrb[0].mxu0
    %v441 = vadd.f32 %v345, %v440
    %v442 = vpop.f32.mrb[0].mxu0
    %443 = vmatprep.mubr.f32.mxu0 0.0
    %v444 = vand.u32 %v58, 4294901760
    %v445 = vsub.f32 %v58, %v444
    %v446 = vand.u32 %v445, 4294901760
    %447 = vmatmul.mubr.f32.gmra.mrb[0].mxu0 %v446
    %v448 = vpop.f32.mrb[0].mxu0
    %v449 = vadd.f32 %v352, %v448
    %v450 = vpop.f32.mrb[0].mxu0
    %451 = vmatprep.mubr.f32.mxu0 0.0
    %v452 = vand.u32 %v61, 4294901760
    %v453 = vsub.f32 %v61, %v452
    %v454 = vand.u32 %v453, 4294901760
    %455 = vmatmul.mubr.f32.gmra.mrb[0].mxu0 %v454
    %v456 = vpop.f32.mrb[0].mxu0
    %v457 = vadd.f32 %v359, %v456
    %v458 = vpop.f32.mrb[0].mxu0
    %459 = vdwg.mxu0
    %460 = vmatprep.subr.mxu0 0.0
    %v461 = vand.u32 %v65, 4294901760
    %v462 = vsub.f32 %v65, %v461
    %v463 = vand.u32 %v462, 4294901760
    %464 = vmatpush1.msra.mxu0 %v463
    %465 = vmatprep.subr.mxu0 0.0
    %466 = vmatpush1.msra.mxu0 0.0
    %467 = vmatprep.subr.mxu0 0.0
    %468 = vmatpush1.msra.mxu0 0.0
    %469 = vmatprep.subr.mxu0 0.0
    %470 = vmatpush1.msra.mxu0 0.0
    %471 = vmatprep.subr.mxu0 0.0
    %472 = vmatpush1.msra.mxu0 0.0
    %473 = vmatprep.subr.mxu0 0.0
    %474 = vmatpush1.msra.mxu0 0.0
    %475 = vmatprep.subr.mxu0 0.0
    %476 = vmatpush1.msra.mxu0 0.0
    %477 = vmatprep.subr.mxu0 0.0
    %478 = vmatpush1.msra.mxu0 0.0
    %479 = vmatprep.subr.mxu0 0.0
    %480 = vmatpush1.msra.mxu0 0.0
    %481 = vmatprep.subr.mxu0 0.0
    %482 = vmatpush1.msra.mxu0 0.0
    %483 = vmatprep.subr.mxu0 0.0
    %484 = vmatpush1.msra.mxu0 0.0
    %485 = vmatprep.subr.mxu0 0.0
    %486 = vmatpush1.msra.mxu0 0.0
    %487 = vmatprep.subr.mxu0 0.0
    %488 = vmatpush1.msra.mxu0 0.0
    %489 = vmatprep.subr.mxu0 0.0
    %490 = vmatpush1.msra.mxu0 0.0
    %491 = vmatprep.subr.mxu0 0.0
    %492 = vmatpush1.msra.mxu0 0.0
    %493 = vmatprep.subr.mxu0 0.0
    %494 = vmatpush1.msra.mxu0 0.0
    %495 = vmatprep.subr.mxu0 0.0
    %496 = vmatpush1.msra.mxu0 0.0
    %497 = vmatprep.subr.mxu0 0.0
    %498 = vmatpush1.msra.mxu0 0.0
    %499 = vmatprep.subr.mxu0 0.0
    %500 = vmatpush1.msra.mxu0 0.0
    %501 = vmatprep.subr.mxu0 0.0
    %502 = vmatpush1.msra.mxu0 0.0
    %503 = vmatprep.subr.mxu0 0.0
    %504 = vmatpush1.msra.mxu0 0.0
    %505 = vmatprep.subr.mxu0 0.0
    %506 = vmatpush1.msra.mxu0 0.0
    %507 = vmatprep.subr.mxu0 0.0
    %508 = vmatpush1.msra.mxu0 0.0
    %509 = vmatprep.subr.mxu0 0.0
    %510 = vmatpush1.msra.mxu0 0.0
    %511 = vmatprep.subr.mxu0 0.0
    %512 = vmatpush1.msra.mxu0 0.0
    %513 = vmatprep.subr.mxu0 0.0
    %514 = vmatpush1.msra.mxu0 0.0
    %515 = vmatprep.subr.mxu0 0.0
    %516 = vmatpush1.msra.mxu0 0.0
    %517 = vmatprep.subr.mxu0 0.0
    %518 = vmatpush1.msra.mxu0 0.0
    %519 = vmatprep.subr.mxu0 0.0
    %520 = vmatpush1.msra.mxu0 0.0
    %521 = vmatprep.subr.mxu0 0.0
    %522 = vmatpush1.msra.mxu0 0.0
    %523 = vmatprep.subr.mxu0 0.0
    %524 = vmatpush1.msra.mxu0 0.0
    %525 = vmatprep.subr.mxu0 0.0
    %526 = vmatpush1.msra.mxu0 0.0
    %527 = vmatprep.mubr.f32.mxu0 0.0
    %v528 = vand.u32 %v52, 4294901760
    %529 = vmatmul.mubr.f32.gmra.mrb[0].mxu0 %v528
    %v530 = vpop.f32.mrb[0].mxu0
    %v531 = vadd.f32 %v433, %v530
    %v532 = vpop.f32.mrb[0].mxu0
    %533 = vmatprep.mubr.f32.mxu0 0.0
    %v534 = vand.u32 %v55, 4294901760
    %535 = vmatmul.mubr.f32.gmra.mrb[0].mxu0 %v534
    %v536 = vpop.f32.mrb[0].mxu0
    %v537 = vadd.f32 %v441, %v536
    %v538 = vpop.f32.mrb[0].mxu0
    %539 = vmatprep.mubr.f32.mxu0 0.0
    %v540 = vand.u32 %v58, 4294901760
    %541 = vmatmul.mubr.f32.gmra.mrb[0].mxu0 %v540
    %v542 = vpop.f32.mrb[0].mxu0
    %v543 = vadd.f32 %v449, %v542
    %v544 = vpop.f32.mrb[0].mxu0
    %545 = vmatprep.mubr.f32.mxu0 0.0
    %v546 = vand.u32 %v61, 4294901760
    %547 = vmatmul.mubr.f32.gmra.mrb[0].mxu0 %v546
    %v548 = vpop.f32.mrb[0].mxu0
    %v549 = vadd.f32 %v457, %v548
    %v550 = vpop.f32.mrb[0].mxu0
    %551 = vdwg.mxu0
    %552 = vmatprep.subr.mxu0 0.0
    %v553 = vand.u32 %v65, 4294901760
    %554 = vmatpush1.msra.mxu0 %v553
    %555 = vmatprep.subr.mxu0 0.0
    %556 = vmatpush1.msra.mxu0 0.0
    %557 = vmatprep.subr.mxu0 0.0
    %558 = vmatpush1.msra.mxu0 0.0
    %559 = vmatprep.subr.mxu0 0.0
    %560 = vmatpush1.msra.mxu0 0.0
    %561 = vmatprep.subr.mxu0 0.0
    %562 = vmatpush1.msra.mxu0 0.0
    %563 = vmatprep.subr.mxu0 0.0
    %564 = vmatpush1.msra.mxu0 0.0
    %565 = vmatprep.subr.mxu0 0.0
    %566 = vmatpush1.msra.mxu0 0.0
    %567 = vmatprep.subr.mxu0 0.0
    %568 = vmatpush1.msra.mxu0 0.0
    %569 = vmatprep.subr.mxu0 0.0
    %570 = vmatpush1.msra.mxu0 0.0
    %571 = vmatprep.subr.mxu0 0.0
    %572 = vmatpush1.msra.mxu0 0.0
    %573 = vmatprep.subr.mxu0 0.0
    %574 = vmatpush1.msra.mxu0 0.0
    %575 = vmatprep.subr.mxu0 0.0
    %576 = vmatpush1.msra.mxu0 0.0
    %577 = vmatprep.subr.mxu0 0.0
    %578 = vmatpush1.msra.mxu0 0.0
    %579 = vmatprep.subr.mxu0 0.0
    %580 = vmatpush1.msra.mxu0 0.0
    %581 = vmatprep.subr.mxu0 0.0
    %582 = vmatpush1.msra.mxu0 0.0
    %583 = vmatprep.subr.mxu0 0.0
    %584 = vmatpush1.msra.mxu0 0.0
    %585 = vmatprep.subr.mxu0 0.0
    %586 = vmatpush1.msra.mxu0 0.0
    %587 = vmatprep.subr.mxu0 0.0
    %588 = vmatpush1.msra.mxu0 0.0
    %589 = vmatprep.subr.mxu0 0.0
    %590 = vmatpush1.msra.mxu0 0.0
    %591 = vmatprep.subr.mxu0 0.0
    %592 = vmatpush1.msra.mxu0 0.0
    %593 = vmatprep.subr.mxu0 0.0
    %594 = vmatpush1.msra.mxu0 0.0
    %595 = vmatprep.subr.mxu0 0.0
    %596 = vmatpush1.msra.mxu0 0.0
    %597 = vmatprep.subr.mxu0 0.0
    %598 = vmatpush1.msra.mxu0 0.0
    %599 = vmatprep.subr.mxu0 0.0
    %600 = vmatpush1.msra.mxu0 0.0
    %601 = vmatprep.subr.mxu0 0.0
    %602 = vmatpush1.msra.mxu0 0.0
    %603 = vmatprep.subr.mxu0 0.0
    %604 = vmatpush1.msra.mxu0 0.0
    %605 = vmatprep.subr.mxu0 0.0
    %606 = vmatpush1.msra.mxu0 0.0
    %607 = vmatprep.subr.mxu0 0.0
    %608 = vmatpush1.msra.mxu0 0.0
    %609 = vmatprep.subr.mxu0 0.0
    %610 = vmatpush1.msra.mxu0 0.0
    %611 = vmatprep.subr.mxu0 0.0
    %612 = vmatpush1.msra.mxu0 0.0
    %613 = vmatprep.subr.mxu0 0.0
    %614 = vmatpush1.msra.mxu0 0.0
    %615 = vmatprep.subr.mxu0 0.0
    %616 = vmatpush1.msra.mxu0 0.0
    %617 = vmatprep.mubr.f32.mxu0 0.0
    %v618 = vand.u32 %v52, 4294901760
    %619 = vmatmul.mubr.f32.gmra.mrb[0].mxu0 %v618
    %v620 = vpop.f32.mrb[0].mxu0
    %v621 = vadd.f32 %v531, %v620
    %v622 = vpop.f32.mrb[0].mxu0
    %623 = vmatprep.mubr.f32.mxu0 0.0
    %v624 = vand.u32 %v55, 4294901760
    %625 = vmatmul.mubr.f32.gmra.mrb[0].mxu0 %v624
    %v626 = vpop.f32.mrb[0].mxu0
    %v627 = vadd.f32 %v537, %v626
    %v628 = vpop.f32.mrb[0].mxu0
    %629 = vmatprep.mubr.f32.mxu0 0.0
    %v630 = vand.u32 %v58, 4294901760
    %631 = vmatmul.mubr.f32.gmra.mrb[0].mxu0 %v630
    %v632 = vpop.f32.mrb[0].mxu0
    %v633 = vadd.f32 %v543, %v632
    %v634 = vpop.f32.mrb[0].mxu0
    %635 = vmatprep.mubr.f32.mxu0 0.0
    %v636 = vand.u32 %v61, 4294901760
    %637 = vmatmul.mubr.f32.gmra.mrb[0].mxu0 %v636
    %v638 = vpop.f32.mrb[0].mxu0
    %v639 = vadd.f32 %v549, %v638
    %v640 = vpop.f32.mrb[0].mxu0
    %641 = vdwg.mxu0
    %v642 = vxor.u32 %v621, 2147483648
    %v643 = vxor.u32 %v627, 2147483648
    %v644 = vxor.u32 %v633, 2147483648
    %v645 = vxor.u32 %v639, 2147483648
    %v646 = vmul.f32 %v642, 1.442695
    %v647 = vpow.pop %v646
    %v648 = vmul.f32 %v643, 1.442695
    %v649 = vpow.pop %v648
    %v650 = vmul.f32 %v644, 1.442695
    %v651 = vpow.pop %v650
    %v652 = vmul.f32 %v645, 1.442695
    %v653 = vpow.pop %v652
    %v654 = vadd.f32 %v647, 1.0
    %v655 = vadd.f32 %v649, 1.0
    %v656 = vadd.f32 %v651, 1.0
    %v657 = vadd.f32 %v653, 1.0
    %v658 = vrcp.pop %v654
    %v659 = vmul.f32 1.0, %v658
    %v660 = vrcp.pop %v655
    %v661 = vmul.f32 1.0, %v660
    %v662 = vrcp.pop %v656
    %v663 = vmul.f32 1.0, %v662
    %v664 = vrcp.pop %v657
    %v665 = vmul.f32 1.0, %v664
    %v666 = vld [vmem:[%s3] sm:$0x7]
    %v667 = vld [vmem:[%s4] sm:$0x7]
    %669 = vset.pattern.permute.xlu0 0
    %670 = vperm.xlu0 %669, %v667
    %v671 = vpop.permute.xlu0 %670
    %vm673 = vcmask 261120
    %v675 = vsel %vm673, %v666, 0
    %677 = vmatprep.subr.mxu0 0.0
    %v678 = vand.u32 %v659, 4294901760
    %679 = vmatpush1.msra.mxu0 %v678
    %680 = vmatprep.subr.mxu0 0.0
    %v681 = vand.u32 %v661, 4294901760
    %682 = vmatpush1.msra.mxu0 %v681
    %683 = vmatprep.subr.mxu0 0.0
    %v684 = vand.u32 %v663, 4294901760
    %685 = vmatpush1.msra.mxu0 %v684
    %686 = vmatprep.subr.mxu0 0.0
    %v687 = vand.u32 %v665, 4294901760
    %688 = vmatpush1.msra.mxu0 %v687
    %689 = vmatprep.subr.mxu0 0.0
    %690 = vmatpush1.msra.mxu0 0.0
    %691 = vmatprep.subr.mxu0 0.0
    %692 = vmatpush1.msra.mxu0 0.0
    %693 = vmatprep.subr.mxu0 0.0
    %694 = vmatpush1.msra.mxu0 0.0
    %695 = vmatprep.subr.mxu0 0.0
    %696 = vmatpush1.msra.mxu0 0.0
    %697 = vmatprep.subr.mxu0 0.0
    %698 = vmatpush1.msra.mxu0 0.0
    %699 = vmatprep.subr.mxu0 0.0
    %700 = vmatpush1.msra.mxu0 0.0
    %701 = vmatprep.subr.mxu0 0.0
    %702 = vmatpush1.msra.mxu0 0.0
    %703 = vmatprep.subr.mxu0 0.0
    %704 = vmatpush1.msra.mxu0 0.0
    %705 = vmatprep.subr.mxu0 0.0
    %706 = vmatpush1.msra.mxu0 0.0
    %707 = vmatprep.subr.mxu0 0.0
    %708 = vmatpush1.msra.mxu0 0.0
    %709 = vmatprep.subr.mxu0 0.0
    %710 = vmatpush1.msra.mxu0 0.0
    %711 = vmatprep.subr.mxu0 0.0
    %712 = vmatpush1.msra.mxu0 0.0
    %713 = vmatprep.subr.mxu0 0.0
    %714 = vmatpush1.msra.mxu0 0.0
    %715 = vmatprep.subr.mxu0 0.0
    %716 = vmatpush1.msra.mxu0 0.0
    %717 = vmatprep.subr.mxu0 0.0
    %718 = vmatpush1.msra.mxu0 0.0
    %719 = vmatprep.subr.mxu0 0.0
    %720 = vmatpush1.msra.mxu0 0.0
    %721 = vmatprep.subr.mxu0 0.0
    %722 = vmatpush1.msra.mxu0 0.0
    %723 = vmatprep.subr.mxu0 0.0
    %724 = vmatpush1.msra.mxu0 0.0
    %725 = vmatprep.subr.mxu0 0.0
    %726 = vmatpush1.msra.mxu0 0.0
    %727 = vmatprep.subr.mxu0 0.0
    %728 = vmatpush1.msra.mxu0 0.0
    %729 = vmatprep.subr.mxu0 0.0
    %730 = vmatpush1.msra.mxu0 0.0
    %731 = vmatprep.subr.mxu0 0.0
    %732 = vmatpush1.msra.mxu0 0.0
    %733 = vmatprep.subr.mxu0 0.0
    %734 = vmatpush1.msra.mxu0 0.0
    %735 = vmatprep.subr.mxu0 0.0
    %736 = vmatpush1.msra.mxu0 0.0
    %737 = vmatprep.subr.mxu0 0.0
    %738 = vmatpush1.msra.mxu0 0.0
    %739 = vmatprep.subr.mxu0 0.0
    %740 = vmatpush1.msra.mxu0 0.0
    %741 = vmatprep.subr.mxu0 0.0
    %742 = vmatpush1.msra.mxu0 0.0
    %743 = vmatprep.subr.mxu0 0.0
    %744 = vmatpush1.msra.mxu0 0.0
    %745 = vmatprep.mubr.f32.mxu0 0.0
    %v746 = vand.u32 %v675, 4294901760
    %v747 = vsub.f32 %v675, %v746
    %v748 = vand.u32 %v747, 4294901760
    %v749 = vsub.f32 %v747, %v748
    %v750 = vand.u32 %v749, 4294901760
    %751 = vmatmul.mubr.f32.gmra.mrb[0].mxu0 %v750
    %v752 = vpop.f32.mrb[0].mxu0
    %v753 = vadd.f32 %v671, %v752
    %v754 = vpop.f32.mrb[0].mxu0
    %755 = vdwg.mxu0
    %756 = vmatprep.subr.mxu0 0.0
    %v757 = vand.u32 %v659, 4294901760
    %v758 = vsub.f32 %v659, %v757
    %v759 = vand.u32 %v758, 4294901760
    %v760 = vsub.f32 %v758, %v759
    %v761 = vand.u32 %v760, 4294901760
    %762 = vmatpush1.msra.mxu0 %v761
    %763 = vmatprep.subr.mxu0 0.0
    %v764 = vand.u32 %v661, 4294901760
    %v765 = vsub.f32 %v661, %v764
    %v766 = vand.u32 %v765, 4294901760
    %v767 = vsub.f32 %v765, %v766
    %v768 = vand.u32 %v767, 4294901760
    %769 = vmatpush1.msra.mxu0 %v768
    %770 = vmatprep.subr.mxu0 0.0
    %v771 = vand.u32 %v663, 4294901760
    %v772 = vsub.f32 %v663, %v771
    %v773 = vand.u32 %v772, 4294901760
    %v774 = vsub.f32 %v772, %v773
    %v775 = vand.u32 %v774, 4294901760
    %776 = vmatpush1.msra.mxu0 %v775
    %777 = vmatprep.subr.mxu0 0.0
    %v778 = vand.u32 %v665, 4294901760
    %v779 = vsub.f32 %v665, %v778
    %v780 = vand.u32 %v779, 4294901760
    %v781 = vsub.f32 %v779, %v780
    %v782 = vand.u32 %v781, 4294901760
    %783 = vmatpush1.msra.mxu0 %v782
    %784 = vmatprep.subr.mxu0 0.0
    %785 = vmatpush1.msra.mxu0 0.0
    %786 = vmatprep.subr.mxu0 0.0
    %787 = vmatpush1.msra.mxu0 0.0
    %788 = vmatprep.subr.mxu0 0.0
    %789 = vmatpush1.msra.mxu0 0.0
    %790 = vmatprep.subr.mxu0 0.0
    %791 = vmatpush1.msra.mxu0 0.0
    %792 = vmatprep.subr.mxu0 0.0
    %793 = vmatpush1.msra.mxu0 0.0
    %794 = vmatprep.subr.mxu0 0.0
    %795 = vmatpush1.msra.mxu0 0.0
    %796 = vmatprep.subr.mxu0 0.0
    %797 = vmatpush1.msra.mxu0 0.0
    %798 = vmatprep.subr.mxu0 0.0
    %799 = vmatpush1.msra.mxu0 0.0
    %800 = vmatprep.subr.mxu0 0.0
    %801 = vmatpush1.msra.mxu0 0.0
    %802 = vmatprep.subr.mxu0 0.0
    %803 = vmatpush1.msra.mxu0 0.0
    %804 = vmatprep.subr.mxu0 0.0
    %805 = vmatpush1.msra.mxu0 0.0
    %806 = vmatprep.subr.mxu0 0.0
    %807 = vmatpush1.msra.mxu0 0.0
    %808 = vmatprep.subr.mxu0 0.0
    %809 = vmatpush1.msra.mxu0 0.0
    %810 = vmatprep.subr.mxu0 0.0
    %811 = vmatpush1.msra.mxu0 0.0
    %812 = vmatprep.subr.mxu0 0.0
    %813 = vmatpush1.msra.mxu0 0.0
    %814 = vmatprep.subr.mxu0 0.0
    %815 = vmatpush1.msra.mxu0 0.0
    %816 = vmatprep.subr.mxu0 0.0
    %817 = vmatpush1.msra.mxu0 0.0
    %818 = vmatprep.subr.mxu0 0.0
    %819 = vmatpush1.msra.mxu0 0.0
    %820 = vmatprep.subr.mxu0 0.0
    %821 = vmatpush1.msra.mxu0 0.0
    %822 = vmatprep.subr.mxu0 0.0
    %823 = vmatpush1.msra.mxu0 0.0
    %824 = vmatprep.subr.mxu0 0.0
    %825 = vmatpush1.msra.mxu0 0.0
    %826 = vmatprep.subr.mxu0 0.0
    %827 = vmatpush1.msra.mxu0 0.0
    %828 = vmatprep.subr.mxu0 0.0
    %829 = vmatpush1.msra.mxu0 0.0
    %830 = vmatprep.subr.mxu0 0.0
    %831 = vmatpush1.msra.mxu0 0.0
    %832 = vmatprep.subr.mxu0 0.0
    %833 = vmatpush1.msra.mxu0 0.0
    %834 = vmatprep.subr.mxu0 0.0
    %835 = vmatpush1.msra.mxu0 0.0
    %836 = vmatprep.subr.mxu0 0.0
    %837 = vmatpush1.msra.mxu0 0.0
    %838 = vmatprep.subr.mxu0 0.0
    %839 = vmatpush1.msra.mxu0 0.0
    %840 = vmatprep.mubr.f32.mxu0 0.0
    %v841 = vand.u32 %v675, 4294901760
    %842 = vmatmul.mubr.f32.gmra.mrb[0].mxu0 %v841
    %v843 = vpop.f32.mrb[0].mxu0
    %v844 = vadd.f32 %v753, %v843
    %v845 = vpop.f32.mrb[0].mxu0
    %846 = vdwg.mxu0
    %847 = vmatprep.subr.mxu0 0.0
    %v848 = vand.u32 %v659, 4294901760
    %v849 = vsub.f32 %v659, %v848
    %850 = vmatpush1.msra.mxu0 %v849
    %851 = vmatprep.subr.mxu0 0.0
    %v852 = vand.u32 %v661, 4294901760
    %v853 = vsub.f32 %v661, %v852
    %854 = vmatpush1.msra.mxu0 %v853
    %855 = vmatprep.subr.mxu0 0.0
    %v856 = vand.u32 %v663, 4294901760
    %v857 = vsub.f32 %v663, %v856
    %858 = vmatpush1.msra.mxu0 %v857
    %859 = vmatprep.subr.mxu0 0.0
    %v860 = vand.u32 %v665, 4294901760
    %v861 = vsub.f32 %v665, %v860
    %862 = vmatpush1.msra.mxu0 %v861
    %863 = vmatprep.subr.mxu0 0.0
    %864 = vmatpush1.msra.mxu0 0.0
    %865 = vmatprep.subr.mxu0 0.0
    %866 = vmatpush1.msra.mxu0 0.0
    %867 = vmatprep.subr.mxu0 0.0
    %868 = vmatpush1.msra.mxu0 0.0
    %869 = vmatprep.subr.mxu0 0.0
    %870 = vmatpush1.msra.mxu0 0.0
    %871 = vmatprep.subr.mxu0 0.0
    %872 = vmatpush1.msra.mxu0 0.0
    %873 = vmatprep.subr.mxu0 0.0
    %874 = vmatpush1.msra.mxu0 0.0
    %875 = vmatprep.subr.mxu0 0.0
    %876 = vmatpush1.msra.mxu0 0.0
    %877 = vmatprep.subr.mxu0 0.0
    %878 = vmatpush1.msra.mxu0 0.0
    %879 = vmatprep.subr.mxu0 0.0
    %880 = vmatpush1.msra.mxu0 0.0
    %881 = vmatprep.subr.mxu0 0.0
    %882 = vmatpush1.msra.mxu0 0.0
    %883 = vmatprep.subr.mxu0 0.0
    %884 = vmatpush1.msra.mxu0 0.0
    %885 = vmatprep.subr.mxu0 0.0
    %886 = vmatpush1.msra.mxu0 0.0
    %887 = vmatprep.subr.mxu0 0.0
    %888 = vmatpush1.msra.mxu0 0.0
    %889 = vmatprep.subr.mxu0 0.0
    %890 = vmatpush1.msra.mxu0 0.0
    %891 = vmatprep.subr.mxu0 0.0
    %892 = vmatpush1.msra.mxu0 0.0
    %893 = vmatprep.subr.mxu0 0.0
    %894 = vmatpush1.msra.mxu0 0.0
    %895 = vmatprep.subr.mxu0 0.0
    %896 = vmatpush1.msra.mxu0 0.0
    %897 = vmatprep.subr.mxu0 0.0
    %898 = vmatpush1.msra.mxu0 0.0
    %899 = vmatprep.subr.mxu0 0.0
    %900 = vmatpush1.msra.mxu0 0.0
    %901 = vmatprep.subr.mxu0 0.0
    %902 = vmatpush1.msra.mxu0 0.0
    %903 = vmatprep.subr.mxu0 0.0
    %904 = vmatpush1.msra.mxu0 0.0
    %905 = vmatprep.subr.mxu0 0.0
    %906 = vmatpush1.msra.mxu0 0.0
    %907 = vmatprep.subr.mxu0 0.0
    %908 = vmatpush1.msra.mxu0 0.0
    %909 = vmatprep.subr.mxu0 0.0
    %910 = vmatpush1.msra.mxu0 0.0
    %911 = vmatprep.subr.mxu0 0.0
    %912 = vmatpush1.msra.mxu0 0.0
    %913 = vmatprep.subr.mxu0 0.0
    %914 = vmatpush1.msra.mxu0 0.0
    %915 = vmatprep.subr.mxu0 0.0
    %916 = vmatpush1.msra.mxu0 0.0
    %917 = vmatprep.subr.mxu0 0.0
    %918 = vmatpush1.msra.mxu0 0.0
    %919 = vmatprep.mubr.f32.mxu0 0.0
    %v920 = vand.u32 %v675, 4294901760
    %v921 = vsub.f32 %v675, %v920
    %922 = vmatmul.mubr.f32.gmra.mrb[0].mxu0 %v921
    %v923 = vpop.f32.mrb[0].mxu0
    %v924 = vadd.f32 %v844, %v923
    %v925 = vpop.f32.mrb[0].mxu0
    %926 = vdwg.mxu0
    %927 = vmatprep.subr.mxu0 0.0
    %v928 = vand.u32 %v659, 4294901760
    %929 = vmatpush1.msra.mxu0 %v928
    %930 = vmatprep.subr.mxu0 0.0
    %v931 = vand.u32 %v661, 4294901760
    %932 = vmatpush1.msra.mxu0 %v931
    %933 = vmatprep.subr.mxu0 0.0
    %v934 = vand.u32 %v663, 4294901760
    %935 = vmatpush1.msra.mxu0 %v934
    %936 = vmatprep.subr.mxu0 0.0
    %v937 = vand.u32 %v665, 4294901760
    %938 = vmatpush1.msra.mxu0 %v937
    %939 = vmatprep.subr.mxu0 0.0
    %940 = vmatpush1.msra.mxu0 0.0
    %941 = vmatprep.subr.mxu0 0.0
    %942 = vmatpush1.msra.mxu0 0.0
    %943 = vmatprep.subr.mxu0 0.0
    %944 = vmatpush1.msra.mxu0 0.0
    %945 = vmatprep.subr.mxu0 0.0
    %946 = vmatpush1.msra.mxu0 0.0
    %947 = vmatprep.subr.mxu0 0.0
    %948 = vmatpush1.msra.mxu0 0.0
    %949 = vmatprep.subr.mxu0 0.0
    %950 = vmatpush1.msra.mxu0 0.0
    %951 = vmatprep.subr.mxu0 0.0
    %952 = vmatpush1.msra.mxu0 0.0
    %953 = vmatprep.subr.mxu0 0.0
    %954 = vmatpush1.msra.mxu0 0.0
    %955 = vmatprep.subr.mxu0 0.0
    %956 = vmatpush1.msra.mxu0 0.0
    %957 = vmatprep.subr.mxu0 0.0
    %958 = vmatpush1.msra.mxu0 0.0
    %959 = vmatprep.subr.mxu0 0.0
    %960 = vmatpush1.msra.mxu0 0.0
    %961 = vmatprep.subr.mxu0 0.0
    %962 = vmatpush1.msra.mxu0 0.0
    %963 = vmatprep.subr.mxu0 0.0
    %964 = vmatpush1.msra.mxu0 0.0
    %965 = vmatprep.subr.mxu0 0.0
    %966 = vmatpush1.msra.mxu0 0.0
    %967 = vmatprep.subr.mxu0 0.0
    %968 = vmatpush1.msra.mxu0 0.0
    %969 = vmatprep.subr.mxu0 0.0
    %970 = vmatpush1.msra.mxu0 0.0
    %971 = vmatprep.subr.mxu0 0.0
    %972 = vmatpush1.msra.mxu0 0.0
    %973 = vmatprep.subr.mxu0 0.0
    %974 = vmatpush1.msra.mxu0 0.0
    %975 = vmatprep.subr.mxu0 0.0
    %976 = vmatpush1.msra.mxu0 0.0
    %977 = vmatprep.subr.mxu0 0.0
    %978 = vmatpush1.msra.mxu0 0.0
    %979 = vmatprep.subr.mxu0 0.0
    %980 = vmatpush1.msra.mxu0 0.0
    %981 = vmatprep.subr.mxu0 0.0
    %982 = vmatpush1.msra.mxu0 0.0
    %983 = vmatprep.subr.mxu0 0.0
    %984 = vmatpush1.msra.mxu0 0.0
    %985 = vmatprep.subr.mxu0 0.0
    %986 = vmatpush1.msra.mxu0 0.0
    %987 = vmatprep.subr.mxu0 0.0
    %988 = vmatpush1.msra.mxu0 0.0
    %989 = vmatprep.subr.mxu0 0.0
    %990 = vmatpush1.msra.mxu0 0.0
    %991 = vmatprep.subr.mxu0 0.0
    %992 = vmatpush1.msra.mxu0 0.0
    %993 = vmatprep.subr.mxu0 0.0
    %994 = vmatpush1.msra.mxu0 0.0
    %995 = vmatprep.mubr.f32.mxu0 0.0
    %v996 = vand.u32 %v675, 4294901760
    %v997 = vsub.f32 %v675, %v996
    %v998 = vand.u32 %v997, 4294901760
    %999 = vmatmul.mubr.f32.gmra.mrb[0].mxu0 %v998
    %v1000 = vpop.f32.mrb[0].mxu0
    %v1001 = vadd.f32 %v924, %v1000
    %v1002 = vpop.f32.mrb[0].mxu0
    %1003 = vdwg.mxu0
    %1004 = vmatprep.subr.mxu0 0.0
    %v1005 = vand.u32 %v659, 4294901760
    %v1006 = vsub.f32 %v659, %v1005
    %v1007 = vand.u32 %v1006, 4294901760
    %1008 = vmatpush1.msra.mxu0 %v1007
    %1009 = vmatprep.subr.mxu0 0.0
    %v1010 = vand.u32 %v661, 4294901760
    %v1011 = vsub.f32 %v661, %v1010
    %v1012 = vand.u32 %v1011, 4294901760
    %1013 = vmatpush1.msra.mxu0 %v1012
    %1014 = vmatprep.subr.mxu0 0.0
    %v1015 = vand.u32 %v663, 4294901760
    %v1016 = vsub.f32 %v663, %v1015
    %v1017 = vand.u32 %v1016, 4294901760
    %1018 = vmatpush1.msra.mxu0 %v1017
    %1019 = vmatprep.subr.mxu0 0.0
    %v1020 = vand.u32 %v665, 4294901760
    %v1021 = vsub.f32 %v665, %v1020
    %v1022 = vand.u32 %v1021, 4294901760
    %1023 = vmatpush1.msra.mxu0 %v1022
    %1024 = vmatprep.subr.mxu0 0.0
    %1025 = vmatpush1.msra.mxu0 0.0
    %1026 = vmatprep.subr.mxu0 0.0
    %1027 = vmatpush1.msra.mxu0 0.0
    %1028 = vmatprep.subr.mxu0 0.0
    %1029 = vmatpush1.msra.mxu0 0.0
    %1030 = vmatprep.subr.mxu0 0.0
    %1031 = vmatpush1.msra.mxu0 0.0
    %1032 = vmatprep.subr.mxu0 0.0
    %1033 = vmatpush1.msra.mxu0 0.0
    %1034 = vmatprep.subr.mxu0 0.0
    %1035 = vmatpush1.msra.mxu0 0.0
    %1036 = vmatprep.subr.mxu0 0.0
    %1037 = vmatpush1.msra.mxu0 0.0
    %1038 = vmatprep.subr.mxu0 0.0
    %1039 = vmatpush1.msra.mxu0 0.0
    %1040 = vmatprep.subr.mxu0 0.0
    %1041 = vmatpush1.msra.mxu0 0.0
    %1042 = vmatprep.subr.mxu0 0.0
    %1043 = vmatpush1.msra.mxu0 0.0
    %1044 = vmatprep.subr.mxu0 0.0
    %1045 = vmatpush1.msra.mxu0 0.0
    %1046 = vmatprep.subr.mxu0 0.0
    %1047 = vmatpush1.msra.mxu0 0.0
    %1048 = vmatprep.subr.mxu0 0.0
    %1049 = vmatpush1.msra.mxu0 0.0
    %1050 = vmatprep.subr.mxu0 0.0
    %1051 = vmatpush1.msra.mxu0 0.0
    %1052 = vmatprep.subr.mxu0 0.0
    %1053 = vmatpush1.msra.mxu0 0.0
    %1054 = vmatprep.subr.mxu0 0.0
    %1055 = vmatpush1.msra.mxu0 0.0
    %1056 = vmatprep.subr.mxu0 0.0
    %1057 = vmatpush1.msra.mxu0 0.0
    %1058 = vmatprep.subr.mxu0 0.0
    %1059 = vmatpush1.msra.mxu0 0.0
    %1060 = vmatprep.subr.mxu0 0.0
    %1061 = vmatpush1.msra.mxu0 0.0
    %1062 = vmatprep.subr.mxu0 0.0
    %1063 = vmatpush1.msra.mxu0 0.0
    %1064 = vmatprep.subr.mxu0 0.0
    %1065 = vmatpush1.msra.mxu0 0.0
    %1066 = vmatprep.subr.mxu0 0.0
    %1067 = vmatpush1.msra.mxu0 0.0
    %1068 = vmatprep.subr.mxu0 0.0
    %1069 = vmatpush1.msra.mxu0 0.0
    %1070 = vmatprep.subr.mxu0 0.0
    %1071 = vmatpush1.msra.mxu0 0.0
    %1072 = vmatprep.subr.mxu0 0.0
    %1073 = vmatpush1.msra.mxu0 0.0
    %1074 = vmatprep.subr.mxu0 0.0
    %1075 = vmatpush1.msra.mxu0 0.0
    %1076 = vmatprep.subr.mxu0 0.0
    %1077 = vmatpush1.msra.mxu0 0.0
    %1078 = vmatprep.subr.mxu0 0.0
    %1079 = vmatpush1.msra.mxu0 0.0
    %1080 = vmatprep.mubr.f32.mxu0 0.0
    %v1081 = vand.u32 %v675, 4294901760
    %1082 = vmatmul.mubr.f32.gmra.mrb[0].mxu0 %v1081
    %v1083 = vpop.f32.mrb[0].mxu0
    %v1084 = vadd.f32 %v1001, %v1083
    %v1085 = vpop.f32.mrb[0].mxu0
    %1086 = vdwg.mxu0
    %1087 = vmatprep.subr.mxu0 0.0
    %v1088 = vand.u32 %v659, 4294901760
    %1089 = vmatpush1.msra.mxu0 %v1088
    %1090 = vmatprep.subr.mxu0 0.0
    %v1091 = vand.u32 %v661, 4294901760
    %1092 = vmatpush1.msra.mxu0 %v1091
    %1093 = vmatprep.subr.mxu0 0.0
    %v1094 = vand.u32 %v663, 4294901760
    %1095 = vmatpush1.msra.mxu0 %v1094
    %1096 = vmatprep.subr.mxu0 0.0
    %v1097 = vand.u32 %v665, 4294901760
    %1098 = vmatpush1.msra.mxu0 %v1097
    %1099 = vmatprep.subr.mxu0 0.0
    %1100 = vmatpush1.msra.mxu0 0.0
    %1101 = vmatprep.subr.mxu0 0.0
    %1102 = vmatpush1.msra.mxu0 0.0
    %1103 = vmatprep.subr.mxu0 0.0
    %1104 = vmatpush1.msra.mxu0 0.0
    %1105 = vmatprep.subr.mxu0 0.0
    %1106 = vmatpush1.msra.mxu0 0.0
    %1107 = vmatprep.subr.mxu0 0.0
    %1108 = vmatpush1.msra.mxu0 0.0
    %1109 = vmatprep.subr.mxu0 0.0
    %1110 = vmatpush1.msra.mxu0 0.0
    %1111 = vmatprep.subr.mxu0 0.0
    %1112 = vmatpush1.msra.mxu0 0.0
    %1113 = vmatprep.subr.mxu0 0.0
    %1114 = vmatpush1.msra.mxu0 0.0
    %1115 = vmatprep.subr.mxu0 0.0
    %1116 = vmatpush1.msra.mxu0 0.0
    %1117 = vmatprep.subr.mxu0 0.0
    %1118 = vmatpush1.msra.mxu0 0.0
    %1119 = vmatprep.subr.mxu0 0.0
    %1120 = vmatpush1.msra.mxu0 0.0
    %1121 = vmatprep.subr.mxu0 0.0
    %1122 = vmatpush1.msra.mxu0 0.0
    %1123 = vmatprep.subr.mxu0 0.0
    %1124 = vmatpush1.msra.mxu0 0.0
    %1125 = vmatprep.subr.mxu0 0.0
    %1126 = vmatpush1.msra.mxu0 0.0
    %1127 = vmatprep.subr.mxu0 0.0
    %1128 = vmatpush1.msra.mxu0 0.0
    %1129 = vmatprep.subr.mxu0 0.0
    %1130 = vmatpush1.msra.mxu0 0.0
    %1131 = vmatprep.subr.mxu0 0.0
    %1132 = vmatpush1.msra.mxu0 0.0
    %1133 = vmatprep.subr.mxu0 0.0
    %1134 = vmatpush1.msra.mxu0 0.0
    %1135 = vmatprep.subr.mxu0 0.0
    %1136 = vmatpush1.msra.mxu0 0.0
    %1137 = vmatprep.subr.mxu0 0.0
    %1138 = vmatpush1.msra.mxu0 0.0
    %1139 = vmatprep.subr.mxu0 0.0
    %1140 = vmatpush1.msra.mxu0 0.0
    %1141 = vmatprep.subr.mxu0 0.0
    %1142 = vmatpush1.msra.mxu0 0.0
    %1143 = vmatprep.subr.mxu0 0.0
    %1144 = vmatpush1.msra.mxu0 0.0
    %1145 = vmatprep.subr.mxu0 0.0
    %1146 = vmatpush1.msra.mxu0 0.0
    %1147 = vmatprep.subr.mxu0 0.0
    %1148 = vmatpush1.msra.mxu0 0.0
    %1149 = vmatprep.subr.mxu0 0.0
    %1150 = vmatpush1.msra.mxu0 0.0
    %1151 = vmatprep.subr.mxu0 0.0
    %1152 = vmatpush1.msra.mxu0 0.0
    %1153 = vmatprep.subr.mxu0 0.0
    %1154 = vmatpush1.msra.mxu0 0.0
    %1155 = vmatprep.mubr.f32.mxu0 0.0
    %v1156 = vand.u32 %v675, 4294901760
    %1157 = vmatmul.mubr.f32.gmra.mrb[0].mxu0 %v1156
    %v1158 = vpop.f32.mrb[0].mxu0
    %v1159 = vadd.f32 %v1084, %v1158
    %v1160 = vpop.f32.mrb[0].mxu0
    %1161 = vdwg.mxu0
    %v1162 = vxor.u32 %v1159, 2147483648
    %v1163 = vmul.f32 %v1162, 1.442695
    %v1164 = vpow.pop %v1163
    %v1165 = vadd.f32 %v1164, 1.0
    %v1166 = vrcp.pop %v1165
    %v1167 = vmul.f32 1.0, %v1166
    %1168 = vst [vmem:[#allocation2] sm:$0x7] %v1167
    // Predicated region
    $region22: #{tpu_custom_call.1} parent=1 // pred_check
      _
    $region23: #{tpu_custom_call.1} parent=1 // pred_check_branch
      %1170 = sbr.rel (0) target = $region25
    $region24: #{tpu_custom_call.1} parent=1 // pred_region
      %s1172 = ssub.s32 64, 64
      %1173 = vsyncadd [#allocation3], %s1172
      %s1175 = sshll.u32 [#allocation2], 4
      %s1176 = int_to_ptr.vmem [resolvable:$true] %s1175
      %1178 = dma.vmem_to_hbm [thread:$0]  %s1176, 64, %s5, [#allocation3]
    $region25: #{tpu_custom_call.1} parent=1 // pred_fallthru
      _
    // Predicated region
    $region26: #{tpu_custom_call.1} parent=1 // pred_check
      _
    $region27: #{tpu_custom_call.1} parent=1 // pred_check_branch
      %1180 = sbr.rel (0) target = $region29
    $region28: #{tpu_custom_call.1} parent=1 // pred_region
      %1181 = dma.done [#allocation3], 64
    $region29: #{tpu_custom_call.1} parent=1 // pred_fallthru
      _
    %1182 = vsyncpa [#allocation3], 1

</llo_original>
